<compile_context>
chip_gen: v7x
topology: tpu7x:2x2x1
jax: 0.10.0
libtpu: 0.0.40
codegen_flags: <defaults>
</compile_context>

<pallas_src>
import functools

import jax
import jax.numpy as jnp
import numpy as np
from jax.experimental import pallas as pl
from jax.experimental.pallas import tpu as pltpu


# ----------------------------- Pallas kernel --------------------------------
def _moe_kernel(x_ref, wa_ref, ba_ref, wo_ref, bo_ref, out_ref, *,
                hid_chunk, mxu_dtype):
    """Per row-tile:  out_row = wo . softplus(x @ W_a + b_a) + bo  (lane-dense)."""
    x = x_ref[...].astype(mxu_dtype)                        # (TN, Din); VPU cast
    hid_total = wa_ref.shape[1]
    acc = jnp.zeros(out_ref.shape, jnp.float32)             # (1, TN)
    # Static chunking over HID keeps the (TN, chunk) f32 intermediate small
    # for scaled-up HID (avoids spilling a (HID, TN) slab to VMEM).
    for c0 in range(0, hid_total, hid_chunk):
        csz = min(hid_chunk, hid_total - c0)
        # Fused (experts -> gated mix -> head interleave -> MLP fc1) GEMM chunk.
        h = jnp.dot(x, wa_ref[:, pl.ds(c0, csz)],
                    preferred_element_type=jnp.float32)      # (TN, csz) f32
        h = jax.nn.softplus(h + ba_ref[:, pl.ds(c0, csz)])   # bias + softplus in f32
        # Final Linear(HID -> 1) as a second MXU contraction producing a
        # lane-dense (1, TN) row directly (batch on lanes).
        acc = acc + jax.lax.dot_general(
            wo_ref[:, pl.ds(c0, csz)], h,
            dimension_numbers=(((1,), (1,)), ((), ())),
            preferred_element_type=jnp.float32)
    out_ref[...] = acc + bo_ref[0]


# ------------------------------ glue / wrapper -------------------------------
def _compute_gates(scaling, k_experts):
    """scaling: (H, E) per-head scaling_params.  Returns gates (H, E): top-k
    softmax probabilities scattered back onto the expert slots (== the
    per-head backbone_scores of the reference module)."""
    H, E = scaling.shape
    vals, idx = jax.lax.top_k(scaling, k_experts)             # (H, k)
    probs = jax.nn.softmax(vals, axis=-1)                     # (H, k)
    return jnp.zeros((H, E), jnp.float32).at[
        jnp.arange(H)[:, None], idx].set(probs)


def _invariant_spec(shape):
    """Whole-array block, identical at every grid step -> single-buffer it."""
    if hasattr(pl, "Buffered"):
        return pl.BlockSpec(shape, lambda i: (0, 0), pipeline_mode=pl.Buffered(1))
    return pl.BlockSpec(shape, lambda i: (0, 0))


def moe_forward(x, params, k_experts, *, mxu_dtype=jnp.float32, hid_chunk=512):
    Wb, bb, scaling, w1, b1, wo, bo = params
    N, Din = x.shape
    E, _, D = Wb.shape
    H = scaling.shape[0]
    HID = w1.shape[1]

    # --- gating + orthogonality regularizer (parameter-only -> wrapper) ------
    gates = _compute_gates(scaling, k_experts)                           # (H, E)
    S = gates.T                                                          # (E, H) == score_lst
    loss = jnp.sum((S.T @ S - jnp.eye(H, dtype=jnp.float32)) ** 2)

    # --- fold expert linears + gated mix + head interleave + first MLP layer --
    # multihead_feature[:, d*H + h] = sum_e gates[h, e] * (x @ Wb[e] + bb[e])[:, d]
    w_fused = jnp.einsum('he,eid->idh', gates, Wb).reshape(Din, D * H)   # (Din, D*H)
    b_fused = jnp.einsum('he,ed->dh', gates, bb).reshape(D * H)          # (D*H,)
    W_a = (w_fused @ w1).astype(mxu_dtype)                               # (Din, HID)
    b_a = (b_fused @ w1 + b1).reshape(1, HID).astype(jnp.float32)        # (1, HID)
    wo_row = wo.reshape(1, HID).astype(jnp.float32)                      # (1, HID)
    bo_s = bo.reshape(1).astype(jnp.float32)                             # SMEM scalar

    # --- row tiling: x stays row-major in HBM (no wrapper transpose / pad) ---
    # Tiny-N only: pad once so the output lane dim is >= 128 (lane-dense
    # stores) and TN never exceeds the row count.
    if N < 128:
        x_in, N_x = jnp.pad(x, ((0, 128 - N), (0, 0))), 128
    else:
        x_in, N_x = x, N

    ch = int(min(hid_chunk, HID))
    x_bytes = x_in.dtype.itemsize
    w_bytes = jnp.dtype(mxu_dtype).itemsize
    # VMEM budget per TensorCore ("parallel" row axis replicates the weights on
    # each TC): conservative enough for v5e's 16 MiB default scoped limit and
    # v7x's 64 MiB/TC.  x tiles double-buffered, weights single-buffered.
    budget = 12 * 2 ** 20 - Din * HID * w_bytes - 4 * HID * 4
    per_row = 2 * Din * x_bytes + ch * 4 + 2 * 4
    tn_max = max(128, min(1024, (max(budget, 0) // per_row) // 128 * 128))
    TN = int(min(tn_max, (N_x // 128) * 128))          # multiple of 128, <= N_x
    n_tiles = int(pl.cdiv(N_x, TN))                    # tail tile may be partial
    N_out = n_tiles * TN

    vmem_need = (2 * TN * Din * x_bytes      # double-buffered x tiles
                 + Din * HID * w_bytes       # resident fused weight (1 buffer)
                 + 4 * HID * 4               # b_a + wo rows
                 + 2 * TN * 4                # double-buffered out rows
                 + 2 * TN * ch * 4)          # hid chunk working set + temps
    cp_kwargs = dict(dimension_semantics=("parallel",))   # shard rows on v7x TCs
    if vmem_need > 12 * 2 ** 20:
        cp_kwargs["vmem_limit_bytes"] = int(min(2 * vmem_need, 64 * 2 ** 20))

    kernel = functools.partial(_moe_kernel, hid_chunk=ch, mxu_dtype=mxu_dtype)
    out_slab = pl.pallas_call(
        kernel,
        out_shape=jax.ShapeDtypeStruct((1, N_out), jnp.float32),
        grid=(n_tiles,),
        in_specs=[
            pl.BlockSpec((TN, Din), lambda i: (i, 0)),            # x row tile
            _invariant_spec((Din, HID)),                          # fused weight
            _invariant_spec((1, HID)),                            # fused bias
            _invariant_spec((1, HID)),                            # out-layer weight
            pl.BlockSpec(memory_space=pltpu.MemorySpace.SMEM),    # out-layer bias
        ],
        out_specs=pl.BlockSpec((1, TN), lambda i: (0, i)),        # lane-dense row
        compiler_params=pltpu.CompilerParams(**cp_kwargs),
    )(x_in, W_a, b_a, wo_row, bo_s)

    out = out_slab[0, :N].reshape(N, 1)
    return out, loss


# --------------------------- pure-JAX reference ------------------------------
def moe_reference(x, params, k_experts):
    Wb, bb, scaling, w1, b1, wo, bo = params
    N = x.shape[0]
    E, _, D = Wb.shape
    H = scaling.shape[0]
    Y = jnp.einsum('nd,edk->enk', x, Wb) + bb[:, None, :]                # (E, N, D)
    head_outs, scores = [], []
    for h in range(H):
        vals, idx = jax.lax.top_k(scaling[h], k_experts)
        probs = jax.nn.softmax(vals)
        out = probs[0] * Y[idx[0]]
        for j in range(1, k_experts):
            out = out + probs[j] * Y[idx[j]]
        head_outs.append(out)
        scores.append(jnp.zeros((E,), jnp.float32).at[idx].set(probs))
    feat = jnp.stack(head_outs, axis=-1).reshape(N, D * H)
    S = jnp.stack(scores, axis=-1)                                       # (E, H)
    loss = jnp.sum((S.T @ S - jnp.eye(H)) ** 2)
    hid = jax.nn.softplus(feat @ w1 + b1)
    out = hid @ wo + bo
    return out, loss


# ----------------------------------- main -------------------------------------
if __name__ == "__main__":
    # Small shapes: N structures, Din input features, E backbones, D feature dim,
    # H pseudo-attention heads, K experts per head, hidden = 32*H.
    N, Din = 8, 16
    E, D = 3, 8            # num backbones, backbone_feature_dim
    H = 2                  # num_pseudo_attention_heads
    K = 2                  # k_experts per head
    HID = 32 * H           # MultilayerPerceptronHead hidden_dim
    # TODO(synk): num_out_layers is fixed to 2 here (1 hidden Linear + out Linear).

    key = jax.random.PRNGKey(0)
    ks = jax.random.split(key, 9)
    x = jax.random.normal(ks[0], (N, Din), jnp.float32)

    # Backbone (extractor) params: linear extractors (synthetic stand-in).
    Wb = jax.random.normal(ks[1], (E, Din, D), jnp.float32) / jnp.sqrt(Din)
    bb = 0.1 * jax.random.normal(ks[2], (E, D), jnp.float32)
    # Per-head scaling_params (module inits to ones; randomized here so top-k
    # gating is non-trivial — still deterministic).
    scaling = jax.random.normal(ks[3], (H, E), jnp.float32)
    # MLP head params (torch Linear-style fan-in init).
    w1 = jax.random.uniform(ks[4], (D * H, HID), jnp.float32,
                            -1.0 / np.sqrt(D * H), 1.0 / np.sqrt(D * H))
    b1 = jax.random.uniform(ks[5], (HID,), jnp.float32,
                            -1.0 / np.sqrt(D * H), 1.0 / np.sqrt(D * H))
    wo = jax.random.uniform(ks[6], (HID, 1), jnp.float32,
                            -1.0 / np.sqrt(HID), 1.0 / np.sqrt(HID))
    bo = jax.random.uniform(ks[7], (1,), jnp.float32,
                            -1.0 / np.sqrt(HID), 1.0 / np.sqrt(HID))

    params = (Wb, bb, scaling, w1, b1, wo, bo)

    ref_out, ref_loss = moe_reference(x, params, K)

    # f32 MXU path: tight-tolerance validation path.
    out, loss = moe_forward(x, params, K)
    jax.block_until_ready((out, loss))
    np.testing.assert_allclose(np.asarray(out), np.asarray(ref_out),
                               rtol=1e-4, atol=1e-4)
    np.testing.assert_allclose(np.asarray(loss), np.asarray(ref_loss),
                               rtol=1e-4, atol=1e-4)

    # bf16 MXU operands (f32 accumulation + f32 softplus/epilogue): perf path
    # for scaled configs; checked at a bf16-appropriate looser tolerance.
    out_bf16, _ = moe_forward(x, params, K, mxu_dtype=jnp.bfloat16)
    jax.block_until_ready(out_bf16)
    np.testing.assert_allclose(np.asarray(out_bf16), np.asarray(ref_out),
                               rtol=1e-1, atol=1e-1)

    print("KERNEL_OK")
</pallas_src>

<mosaic_0001>
module attributes {stable_mosaic.version = 11 : i64} {
  func.func @_moe_kernel(%arg0: i32, %arg1: memref<128x16xf32, #tpu.memory_space<vmem>>, %arg2: memref<16x64xf32, #tpu.memory_space<vmem>>, %arg3: memref<1x64xf32, #tpu.memory_space<vmem>>, %arg4: memref<1x64xf32, #tpu.memory_space<vmem>>, %arg5: memref<1xf32, #tpu.memory_space<smem>>, %arg6: memref<1x128xf32, #tpu.memory_space<vmem>>) attributes {dimension_semantics = [#tpu.dimension_semantics<parallel>], iteration_bounds = array<i64: 1>, scalar_prefetch = 0 : i64, scratch_operands = 0 : i64, tpu.core_type = #tpu.core_type<tc>, window_params = [{transform_indices = @transform_0, window_bounds = array<i64: 128, 16>}, {pipeline_mode = #tpu.pipeline_mode<synchronous>, transform_indices = @transform_1, window_bounds = array<i64: 16, 64>}, {pipeline_mode = #tpu.pipeline_mode<synchronous>, transform_indices = @transform_2, window_bounds = array<i64: 1, 64>}, {pipeline_mode = #tpu.pipeline_mode<synchronous>, transform_indices = @transform_3, window_bounds = array<i64: 1, 64>}, {transform_indices = @transform_4, window_bounds = array<i64: 1>}, {transform_indices = @transform_5, window_bounds = array<i64: 1, 128>}]} {
    %c0 = arith.constant 0 : index
    %c0_0 = arith.constant 0 : index
    %0 = vector.load %arg1[%c0, %c0_0] : memref<128x16xf32, #tpu.memory_space<vmem>>, vector<128x16xf32>
    %cst = arith.constant 0.000000e+00 : f32
    %1 = vector.broadcast %cst : f32 to vector<1x128xf32>
    %c0_1 = arith.constant 0 : index
    %c0_2 = arith.constant 0 : index
    %2 = vector.load %arg2[%c0_1, %c0_2] : memref<16x64xf32, #tpu.memory_space<vmem>>, vector<16x64xf32>
    %cst_3 = arith.constant dense<0.000000e+00> : vector<128x64xf32>
    %3 = tpu.matmul %0, %2, %cst_3 {dimension_numbers = #tpu.dot_dimension_numbers<[1], [0], [0], [1], [0, 0, 1, 1], [], []>} : vector<128x16xf32>, vector<16x64xf32>, vector<128x64xf32> -> vector<128x64xf32>
    %c0_4 = arith.constant 0 : index
    %c0_5 = arith.constant 0 : index
    %4 = vector.load %arg3[%c0_4, %c0_5] : memref<1x64xf32, #tpu.memory_space<vmem>>, vector<1x64xf32>
    %5 = vector.broadcast %4 : vector<1x64xf32> to vector<128x64xf32>
    %6 = arith.addf %3, %5 : vector<128x64xf32>
    %cst_6 = arith.constant 0.000000e+00 : f32
    %7 = vector.broadcast %cst_6 : f32 to vector<128x64xf32>
    %8 = arith.maximumf %6, %7 : vector<128x64xf32>
    %9 = vector.broadcast %cst_6 : f32 to vector<128x64xf32>
    %10 = arith.subf %6, %9 : vector<128x64xf32>
    %11 = arith.cmpf one, %10, %10 : vector<128x64xf32>
    %12 = vector.broadcast %cst_6 : f32 to vector<128x64xf32>
    %13 = arith.addf %6, %12 : vector<128x64xf32>
    %14 = math.absf %10 : vector<128x64xf32>
    %cst_7 = arith.constant 0.000000e+00 : f32
    %15 = vector.broadcast %cst_7 : f32 to vector<128x64xf32>
    %16 = arith.subf %15, %14 : vector<128x64xf32>
    %17 = math.exp %16 : vector<128x64xf32>
    %18 = math.log1p %17 : vector<128x64xf32>
    %19 = arith.addf %8, %18 : vector<128x64xf32>
    %20 = arith.select %11, %13, %19 : vector<128x64xi1>, vector<128x64xf32>
    %c0_8 = arith.constant 0 : index
    %c0_9 = arith.constant 0 : index
    %21 = vector.load %arg4[%c0_8, %c0_9] : memref<1x64xf32, #tpu.memory_space<vmem>>, vector<1x64xf32>
    %cst_10 = arith.constant dense<0.000000e+00> : vector<1x128xf32>
    %22 = tpu.matmul %21, %20, %cst_10 {dimension_numbers = #tpu.dot_dimension_numbers<[1], [1], [0], [0], [0, 0, 1, 0], [], []>} : vector<1x64xf32>, vector<128x64xf32>, vector<1x128xf32> -> vector<1x128xf32>
    %23 = arith.addf %1, %22 : vector<1x128xf32>
    %c0_11 = arith.constant 0 : index
    %24 = memref.load %arg5[%c0_11] : memref<1xf32, #tpu.memory_space<smem>>
    %25 = vector.broadcast %24 : f32 to vector<1x128xf32>
    %26 = arith.addf %23, %25 : vector<1x128xf32>
    %c0_12 = arith.constant 0 : index
    %c0_13 = arith.constant 0 : index
    %27 = vector.load %arg6[%c0_12, %c0_13] : memref<1x128xf32, #tpu.memory_space<vmem>>, vector<1x128xf32>
    tpu.vector_store %arg6[%c0_12, %c0_13], %26 {strides = array<i32>} : memref<1x128xf32, #tpu.memory_space<vmem>>, vector<1x128xf32>,
    return
  }
  func.func @transform_0(%arg0: i32) -> (i32, i32) {
    %c0_i32 = arith.constant 0 : i32
    %c0_i32_0 = arith.constant 0 : i32
    return %arg0, %c0_i32 : i32, i32
  }
  func.func @transform_1(%arg0: i32) -> (i32, i32) {
    %c0_i32 = arith.constant 0 : i32
    %c0_i32_0 = arith.constant 0 : i32
    %c0_i32_1 = arith.constant 0 : i32
    return %c0_i32, %c0_i32_0 : i32, i32
  }
  func.func @transform_2(%arg0: i32) -> (i32, i32) {
    %c0_i32 = arith.constant 0 : i32
    %c0_i32_0 = arith.constant 0 : i32
    %c0_i32_1 = arith.constant 0 : i32
    return %c0_i32, %c0_i32_0 : i32, i32
  }
  func.func @transform_3(%arg0: i32) -> (i32, i32) {
    %c0_i32 = arith.constant 0 : i32
    %c0_i32_0 = arith.constant 0 : i32
    %c0_i32_1 = arith.constant 0 : i32
    return %c0_i32, %c0_i32_0 : i32, i32
  }
  func.func @transform_4(%arg0: i32) -> i32 {
    %c0_i32 = arith.constant 0 : i32
    %c0_i32_0 = arith.constant 0 : i32
    return %c0_i32 : i32
  }
  func.func @transform_5(%arg0: i32) -> (i32, i32) {
    %c0_i32 = arith.constant 0 : i32
    %c0_i32_0 = arith.constant 0 : i32
    return %c0_i32, %arg0 : i32, i32
  }
}

</mosaic_0001>

<llo_original>
// kernel: tpu_custom_call.1
$region0: #{tpu_custom_call.1}
  #allocation0 [shape = 'u32[]', space=smem, size = 0x4, offset = 0x4, fixed_abs, tag = 'smem constant byte address 0x4 - core index']
  #allocation1 [shape = 'u32[144,128]{1,0:T(1,128)}', space=vmem, size = 0x12000, scoped, tag = 'internal scratch']
  #allocation2 [shape = 'f32[1]{0:T(128)S(6)}', space=smem, size = 0x200, scoped, tag = 'scoped memory for tpu_custom_call.1']
  %s0 = inlined_call_operand.vmem [shape: f32[128,16], index: 0, kind: input, shape index: {}]
  %s1 = inlined_call_operand.vmem [shape: f32[16,64], index: 1, kind: input, shape index: {}]
  %s2 = inlined_call_operand.vmem [shape: f32[1,64], index: 2, kind: input, shape index: {}]
  %s3 = inlined_call_operand.vmem [shape: f32[1,64], index: 3, kind: input, shape index: {}]
  %s4 = inlined_call_operand.<no memory space> [shape: f32[1], index: 4, kind: input, shape index: {}]
  %s5 = inlined_call_operand.hbm [shape: f32[1,128], index: 5, kind: output, shape index: {}]
  %s6 = sld [smem:[#allocation0]]
  $region30: #{tpu_custom_call.1} parent=0
    _
  %s8 = ssub.s32 1, %s6
  %s9 = scalar_select 0, %s8, %s6
  %10 = sst [smem:[#allocation2]] %s4
  $region1: #{tpu_custom_call.1} parent=0
    #allocation3 [shape = 'u8[512]{0}', space=vmem, size = 0x400, scoped, tag = 'output window, operand 0, single buffered']
    #allocation4 [shape = 's32[1]{0}', space=sflag, size = 0x4, scoped, tag = 'scoped memory for tpu_custom_call.1']
    %11 = vsyncpa [#allocation4], 0
    // Predicated region
    $region2: #{tpu_custom_call.1} parent=1 // pred_check
      _
    $region3: #{tpu_custom_call.1} parent=1 // pred_check_branch
      %13 = sbr.rel (0) target = $region5
    $region4: #{tpu_custom_call.1} parent=1 // pred_region
      _
    $region5: #{tpu_custom_call.1} parent=1 // pred_fallthru
      _
    // Predicated region
    $region6: #{tpu_custom_call.1} parent=1 // pred_check
      _
    $region7: #{tpu_custom_call.1} parent=1 // pred_check_branch
      %15 = sbr.rel (0) target = $region9
    $region8: #{tpu_custom_call.1} parent=1 // pred_region
      _
    $region9: #{tpu_custom_call.1} parent=1 // pred_fallthru
      _
    // Predicated region
    $region10: #{tpu_custom_call.1} parent=1 // pred_check
      _
    $region11: #{tpu_custom_call.1} parent=1 // pred_check_branch
      %17 = sbr.rel (0) target = $region13
    $region12: #{tpu_custom_call.1} parent=1 // pred_region
      _
    $region13: #{tpu_custom_call.1} parent=1 // pred_fallthru
      _
    // Predicated region
    $region14: #{tpu_custom_call.1} parent=1 // pred_check
      _
    $region15: #{tpu_custom_call.1} parent=1 // pred_check_branch
      %19 = sbr.rel (0) target = $region17
    $region16: #{tpu_custom_call.1} parent=1 // pred_region
      _
    $region17: #{tpu_custom_call.1} parent=1 // pred_fallthru
      _
    // Predicated region
    $region18: #{tpu_custom_call.1} parent=1 // pred_check
      _
    $region19: #{tpu_custom_call.1} parent=1 // pred_check_branch
      %21 = sbr.rel (0) target = $region21
    $region20: #{tpu_custom_call.1} parent=1 // pred_region
      _
    $region21: #{tpu_custom_call.1} parent=1 // pred_fallthru
      _
    %v22 = vld [vmem:[%s0] sm:$0xff]
    %v23 = vld [vmem:[%s0 + $0x8] sm:$0xff]
    %v24 = vld [vmem:[%s0 + $0x10] sm:$0xff]
    %v25 = vld [vmem:[%s0 + $0x18] sm:$0xff]
    %v26 = vld [vmem:[%s0 + $0x20] sm:$0xff]
    %v27 = vld [vmem:[%s0 + $0x28] sm:$0xff]
    %v28 = vld [vmem:[%s0 + $0x30] sm:$0xff]
    %v29 = vld [vmem:[%s0 + $0x38] sm:$0xff]
    %v30 = vld [vmem:[%s0 + $0x40] sm:$0xff]
    %v31 = vld [vmem:[%s0 + $0x48] sm:$0xff]
    %v32 = vld [vmem:[%s0 + $0x50] sm:$0xff]
    %v33 = vld [vmem:[%s0 + $0x58] sm:$0xff]
    %v34 = vld [vmem:[%s0 + $0x60] sm:$0xff]
    %v35 = vld [vmem:[%s0 + $0x68] sm:$0xff]
    %v36 = vld [vmem:[%s0 + $0x70] sm:$0xff]
    %v37 = vld [vmem:[%s0 + $0x78] sm:$0xff]
    %v38 = vld [vmem:[%s1] sm:$0xff]
    %v39 = vld [vmem:[%s1 + $0x8] sm:$0xff]
    %v40 = vld [vmem:[%s2] sm:$0x1]
    %v42 = vlaneseq
    %v43 = vshrl.u32 %v42, 7
    %v44 = vsub.s32 0, %v43
    %v45 = vrot.slane %v40, %v44
    %vm47 = vcmask 130048
    %v49 = vsel %vm47, %v22, 0
    %v52 = vsel %vm47, %v23, 0
    %v55 = vsel %vm47, %v24, 0
    %v58 = vsel %vm47, %v25, 0
    %v61 = vsel %vm47, %v26, 0
    %v64 = vsel %vm47, %v27, 0
    %v67 = vsel %vm47, %v28, 0
    %v70 = vsel %vm47, %v29, 0
    %v73 = vsel %vm47, %v30, 0
    %v76 = vsel %vm47, %v31, 0
    %v79 = vsel %vm47, %v32, 0
    %v82 = vsel %vm47, %v33, 0
    %v85 = vsel %vm47, %v34, 0
    %v88 = vsel %vm47, %v35, 0
    %v91 = vsel %vm47, %v36, 0
    %v94 = vsel %vm47, %v37, 0
    %96 = vmatprep.subr.mxu0 0.0
    %97 = vmatpush1.msra.mxu0 %v38
    %98 = vmatprep.subr.mxu0 0.0
    %99 = vmatpush1.msra.mxu0 %v39
    %100 = vmatprep.subr.mxu0 0.0
    %101 = vmatpush1.msra.mxu0 0.0
    %102 = vmatprep.subr.mxu0 0.0
    %103 = vmatpush1.msra.mxu0 0.0
    %104 = vmatprep.subr.mxu0 0.0
    %105 = vmatpush1.msra.mxu0 0.0
    %106 = vmatprep.subr.mxu0 0.0
    %107 = vmatpush1.msra.mxu0 0.0
    %108 = vmatprep.subr.mxu0 0.0
    %109 = vmatpush1.msra.mxu0 0.0
    %110 = vmatprep.subr.mxu0 0.0
    %111 = vmatpush1.msra.mxu0 0.0
    %112 = vmatprep.subr.mxu0 0.0
    %113 = vmatpush1.msra.mxu0 0.0
    %114 = vmatprep.subr.mxu0 0.0
    %115 = vmatpush1.msra.mxu0 0.0
    %116 = vmatprep.subr.mxu0 0.0
    %117 = vmatpush1.msra.mxu0 0.0
    %118 = vmatprep.subr.mxu0 0.0
    %119 = vmatpush1.msra.mxu0 0.0
    %120 = vmatprep.subr.mxu0 0.0
    %121 = vmatpush1.msra.mxu0 0.0
    %122 = vmatprep.subr.mxu0 0.0
    %123 = vmatpush1.msra.mxu0 0.0
    %124 = vmatprep.subr.mxu0 0.0
    %125 = vmatpush1.msra.mxu0 0.0
    %126 = vmatprep.subr.mxu0 0.0
    %127 = vmatpush1.msra.mxu0 0.0
    %128 = vmatprep.subr.mxu0 0.0
    %129 = vmatpush1.msra.mxu0 0.0
    %130 = vmatprep.subr.mxu0 0.0
    %131 = vmatpush1.msra.mxu0 0.0
    %132 = vmatprep.subr.mxu0 0.0
    %133 = vmatpush1.msra.mxu0 0.0
    %134 = vmatprep.subr.mxu0 0.0
    %135 = vmatpush1.msra.mxu0 0.0
    %136 = vmatprep.subr.mxu0 0.0
    %137 = vmatpush1.msra.mxu0 0.0
    %138 = vmatprep.subr.mxu0 0.0
    %139 = vmatpush1.msra.mxu0 0.0
    %140 = vmatprep.subr.mxu0 0.0
    %141 = vmatpush1.msra.mxu0 0.0
    %142 = vmatprep.subr.mxu0 0.0
    %143 = vmatpush1.msra.mxu0 0.0
    %144 = vmatprep.subr.mxu0 0.0
    %145 = vmatpush1.msra.mxu0 0.0
    %146 = vmatprep.subr.mxu0 0.0
    %147 = vmatpush1.msra.mxu0 0.0
    %148 = vmatprep.subr.mxu0 0.0
    %149 = vmatpush1.msra.mxu0 0.0
    %150 = vmatprep.subr.mxu0 0.0
    %151 = vmatpush1.msra.mxu0 0.0
    %152 = vmatprep.subr.mxu0 0.0
    %153 = vmatpush1.msra.mxu0 0.0
    %154 = vmatprep.subr.mxu0 0.0
    %155 = vmatpush1.msra.mxu0 0.0
    %156 = vmatprep.subr.mxu0 0.0
    %157 = vmatpush1.msra.mxu0 0.0
    %158 = vmatprep.subr.mxu0 0.0
    %159 = vmatpush1.msra.mxu0 0.0
    %160 = vmatprep.mubr.f32.mxu0 0.0
    %161 = vmatmul.mubr.f32.gmra.mrb[0].mxu0 %v49
    %v162 = vpop.f32.mrb[0].mxu0
    %v163 = vadd.f32 %v45, %v162
    %v164 = vpop.f32.mrb[0].mxu0
    %165 = vmatprep.mubr.f32.mxu0 0.0
    %166 = vmatmul.mubr.f32.gmra.mrb[0].mxu0 %v52
    %v167 = vpop.f32.mrb[0].mxu0
    %v168 = vadd.f32 %v45, %v167
    %v169 = vpop.f32.mrb[0].mxu0
    %170 = vmatprep.mubr.f32.mxu0 0.0
    %171 = vmatmul.mubr.f32.gmra.mrb[0].mxu0 %v55
    %v172 = vpop.f32.mrb[0].mxu0
    %v173 = vadd.f32 %v45, %v172
    %v174 = vpop.f32.mrb[0].mxu0
    %175 = vmatprep.mubr.f32.mxu0 0.0
    %176 = vmatmul.mubr.f32.gmra.mrb[0].mxu0 %v58
    %v177 = vpop.f32.mrb[0].mxu0
    %v178 = vadd.f32 %v45, %v177
    %v179 = vpop.f32.mrb[0].mxu0
    %180 = vmatprep.mubr.f32.mxu0 0.0
    %181 = vmatmul.mubr.f32.gmra.mrb[0].mxu0 %v61
    %v182 = vpop.f32.mrb[0].mxu0
    %v183 = vadd.f32 %v45, %v182
    %v184 = vpop.f32.mrb[0].mxu0
    %185 = vmatprep.mubr.f32.mxu0 0.0
    %186 = vmatmul.mubr.f32.gmra.mrb[0].mxu0 %v64
    %v187 = vpop.f32.mrb[0].mxu0
    %v188 = vadd.f32 %v45, %v187
    %v189 = vpop.f32.mrb[0].mxu0
    %190 = vmatprep.mubr.f32.mxu0 0.0
    %191 = vmatmul.mubr.f32.gmra.mrb[0].mxu0 %v67
    %v192 = vpop.f32.mrb[0].mxu0
    %v193 = vadd.f32 %v45, %v192
    %v194 = vpop.f32.mrb[0].mxu0
    %195 = vmatprep.mubr.f32.mxu0 0.0
    %196 = vmatmul.mubr.f32.gmra.mrb[0].mxu0 %v70
    %v197 = vpop.f32.mrb[0].mxu0
    %v198 = vadd.f32 %v45, %v197
    %v199 = vpop.f32.mrb[0].mxu0
    %200 = vmatprep.mubr.f32.mxu0 0.0
    %201 = vmatmul.mubr.f32.gmra.mrb[0].mxu0 %v73
    %v202 = vpop.f32.mrb[0].mxu0
    %v203 = vadd.f32 %v45, %v202
    %v204 = vpop.f32.mrb[0].mxu0
    %205 = vmatprep.mubr.f32.mxu0 0.0
    %206 = vmatmul.mubr.f32.gmra.mrb[0].mxu0 %v76
    %v207 = vpop.f32.mrb[0].mxu0
    %v208 = vadd.f32 %v45, %v207
    %v209 = vpop.f32.mrb[0].mxu0
    %210 = vmatprep.mubr.f32.mxu0 0.0
    %211 = vmatmul.mubr.f32.gmra.mrb[0].mxu0 %v79
    %v212 = vpop.f32.mrb[0].mxu0
    %v213 = vadd.f32 %v45, %v212
    %v214 = vpop.f32.mrb[0].mxu0
    %215 = vmatprep.mubr.f32.mxu0 0.0
    %216 = vmatmul.mubr.f32.gmra.mrb[0].mxu0 %v82
    %v217 = vpop.f32.mrb[0].mxu0
    %v218 = vadd.f32 %v45, %v217
    %v219 = vpop.f32.mrb[0].mxu0
    %220 = vmatprep.mubr.f32.mxu0 0.0
    %221 = vmatmul.mubr.f32.gmra.mrb[0].mxu0 %v85
    %v222 = vpop.f32.mrb[0].mxu0
    %v223 = vadd.f32 %v45, %v222
    %v224 = vpop.f32.mrb[0].mxu0
    %225 = vmatprep.mubr.f32.mxu0 0.0
    %226 = vmatmul.mubr.f32.gmra.mrb[0].mxu0 %v88
    %v227 = vpop.f32.mrb[0].mxu0
    %v228 = vadd.f32 %v45, %v227
    %v229 = vpop.f32.mrb[0].mxu0
    %230 = vmatprep.mubr.f32.mxu0 0.0
    %231 = vmatmul.mubr.f32.gmra.mrb[0].mxu0 %v91
    %v232 = vpop.f32.mrb[0].mxu0
    %v233 = vadd.f32 %v45, %v232
    %v234 = vpop.f32.mrb[0].mxu0
    %235 = vmatprep.mubr.f32.mxu0 0.0
    %236 = vmatmul.mubr.f32.gmra.mrb[0].mxu0 %v94
    %v237 = vpop.f32.mrb[0].mxu0
    %v238 = vadd.f32 %v45, %v237
    %v239 = vpop.f32.mrb[0].mxu0
    %240 = vdwg.mxu0
    %v241 = vmax.f32 %v163, 0.0
    %v242 = vmax.f32 %v168, 0.0
    %v243 = vmax.f32 %v173, 0.0
    %v244 = vmax.f32 %v178, 0.0
    %v245 = vmax.f32 %v183, 0.0
    %v246 = vmax.f32 %v188, 0.0
    %v247 = vmax.f32 %v193, 0.0
    %v248 = vmax.f32 %v198, 0.0
    %v249 = vmax.f32 %v203, 0.0
    %v250 = vmax.f32 %v208, 0.0
    %v251 = vmax.f32 %v213, 0.0
    %v252 = vmax.f32 %v218, 0.0
    %v253 = vmax.f32 %v223, 0.0
    %v254 = vmax.f32 %v228, 0.0
    %v255 = vmax.f32 %v233, 0.0
    %v256 = vmax.f32 %v238, 0.0
    %vm257 = vcmp.ne.f32.partialorder %v163, %v163
    %vm258 = vcmp.ne.f32.partialorder %v168, %v168
    %vm259 = vcmp.ne.f32.partialorder %v173, %v173
    %vm260 = vcmp.ne.f32.partialorder %v178, %v178
    %vm261 = vcmp.ne.f32.partialorder %v183, %v183
    %vm262 = vcmp.ne.f32.partialorder %v188, %v188
    %vm263 = vcmp.ne.f32.partialorder %v193, %v193
    %vm264 = vcmp.ne.f32.partialorder %v198, %v198
    %vm265 = vcmp.ne.f32.partialorder %v203, %v203
    %vm266 = vcmp.ne.f32.partialorder %v208, %v208
    %vm267 = vcmp.ne.f32.partialorder %v213, %v213
    %vm268 = vcmp.ne.f32.partialorder %v218, %v218
    %vm269 = vcmp.ne.f32.partialorder %v223, %v223
    %vm270 = vcmp.ne.f32.partialorder %v228, %v228
    %vm271 = vcmp.ne.f32.partialorder %v233, %v233
    %vm272 = vcmp.ne.f32.partialorder %v238, %v238
    %v273 = vadd.f32 %v163, 0.0
    %v274 = vadd.f32 %v168, 0.0
    %v275 = vadd.f32 %v173, 0.0
    %v276 = vadd.f32 %v178, 0.0
    %v277 = vadd.f32 %v183, 0.0
    %v278 = vadd.f32 %v188, 0.0
    %v279 = vadd.f32 %v193, 0.0
    %v280 = vadd.f32 %v198, 0.0
    %v281 = vadd.f32 %v203, 0.0
    %v282 = vadd.f32 %v208, 0.0
    %v283 = vadd.f32 %v213, 0.0
    %v284 = vadd.f32 %v218, 0.0
    %v285 = vadd.f32 %v223, 0.0
    %v286 = vadd.f32 %v228, 0.0
    %v287 = vadd.f32 %v233, 0.0
    %v288 = vadd.f32 %v238, 0.0
    %v289 = vand.u32 2147483647, %v163
    %v290 = vand.u32 2147483647, %v168
    %v291 = vand.u32 2147483647, %v173
    %v292 = vand.u32 2147483647, %v178
    %v293 = vand.u32 2147483647, %v183
    %v294 = vand.u32 2147483647, %v188
    %v295 = vand.u32 2147483647, %v193
    %v296 = vand.u32 2147483647, %v198
    %v297 = vand.u32 2147483647, %v203
    %v298 = vand.u32 2147483647, %v208
    %v299 = vand.u32 2147483647, %v213
    %v300 = vand.u32 2147483647, %v218
    %v301 = vand.u32 2147483647, %v223
    %v302 = vand.u32 2147483647, %v228
    %v303 = vand.u32 2147483647, %v233
    %v304 = vand.u32 2147483647, %v238
    %v305 = vsub.f32 0.0, %v289
    %v306 = vsub.f32 0.0, %v290
    %v307 = vsub.f32 0.0, %v291
    %v308 = vsub.f32 0.0, %v292
    %v309 = vsub.f32 0.0, %v293
    %v310 = vsub.f32 0.0, %v294
    %v311 = vsub.f32 0.0, %v295
    %v312 = vsub.f32 0.0, %v296
    %v313 = vsub.f32 0.0, %v297
    %v314 = vsub.f32 0.0, %v298
    %v315 = vsub.f32 0.0, %v299
    %v316 = vsub.f32 0.0, %v300
    %v317 = vsub.f32 0.0, %v301
    %v318 = vsub.f32 0.0, %v302
    %v319 = vsub.f32 0.0, %v303
    %v320 = vsub.f32 0.0, %v304
    %v321 = vmul.f32 %v305, 1.442695
    %v322 = vpow.pop %v321
    %v323 = vmul.f32 %v306, 1.442695
    %v324 = vpow.pop %v323
    %v325 = vmul.f32 %v307, 1.442695
    %v326 = vpow.pop %v325
    %v327 = vmul.f32 %v308, 1.442695
    %v328 = vpow.pop %v327
    %v329 = vmul.f32 %v309, 1.442695
    %v330 = vpow.pop %v329
    %v331 = vmul.f32 %v310, 1.442695
    %v332 = vpow.pop %v331
    %v333 = vmul.f32 %v311, 1.442695
    %v334 = vpow.pop %v333
    %v335 = vmul.f32 %v312, 1.442695
    %v336 = vpow.pop %v335
    %v337 = vmul.f32 %v313, 1.442695
    %v338 = vpow.pop %v337
    %v339 = vmul.f32 %v314, 1.442695
    %v340 = vpow.pop %v339
    %v341 = vmul.f32 %v315, 1.442695
    %v342 = vpow.pop %v341
    %v343 = vmul.f32 %v316, 1.442695
    %v344 = vpow.pop %v343
    %v345 = vmul.f32 %v317, 1.442695
    %v346 = vpow.pop %v345
    %v347 = vmul.f32 %v318, 1.442695
    %v348 = vpow.pop %v347
    %v349 = vmul.f32 %v319, 1.442695
    %v350 = vpow.pop %v349
    %v351 = vmul.f32 %v320, 1.442695
    %v352 = vpow.pop %v351
    %v353 = vadd.f32 %v322, 1.0
    %v354 = vlog2.pop %v353
    %v355 = vmul.f32 %v354, 0.6931472
    %v356 = vmul.f32 -0.5, %v322
    %v357 = vadd.f32 %v356, 1.0
    %v358 = vmul.f32 %v357, %v322
    %v359 = vand.u32 2147483647, %v322
    %vm360 = vcmp.lt.f32.partialorder %v359, 0.0004427343
    %v361 = vsel %vm360, %v358, %v355
    %v362 = vadd.f32 %v324, 1.0
    %v363 = vlog2.pop %v362
    %v364 = vmul.f32 %v363, 0.6931472
    %v365 = vmul.f32 -0.5, %v324
    %v366 = vadd.f32 %v365, 1.0
    %v367 = vmul.f32 %v366, %v324
    %v368 = vand.u32 2147483647, %v324
    %vm369 = vcmp.lt.f32.partialorder %v368, 0.0004427343
    %v370 = vsel %vm369, %v367, %v364
    %v371 = vadd.f32 %v326, 1.0
    %v372 = vlog2.pop %v371
    %v373 = vmul.f32 %v372, 0.6931472
    %v374 = vmul.f32 -0.5, %v326
    %v375 = vadd.f32 %v374, 1.0
    %v376 = vmul.f32 %v375, %v326
    %v377 = vand.u32 2147483647, %v326
    %vm378 = vcmp.lt.f32.partialorder %v377, 0.0004427343
    %v379 = vsel %vm378, %v376, %v373
    %v380 = vadd.f32 %v328, 1.0
    %v381 = vlog2.pop %v380
    %v382 = vmul.f32 %v381, 0.6931472
    %v383 = vmul.f32 -0.5, %v328
    %v384 = vadd.f32 %v383, 1.0
    %v385 = vmul.f32 %v384, %v328
    %v386 = vand.u32 2147483647, %v328
    %vm387 = vcmp.lt.f32.partialorder %v386, 0.0004427343
    %v388 = vsel %vm387, %v385, %v382
    %v389 = vadd.f32 %v330, 1.0
    %v390 = vlog2.pop %v389
    %v391 = vmul.f32 %v390, 0.6931472
    %v392 = vmul.f32 -0.5, %v330
    %v393 = vadd.f32 %v392, 1.0
    %v394 = vmul.f32 %v393, %v330
    %v395 = vand.u32 2147483647, %v330
    %vm396 = vcmp.lt.f32.partialorder %v395, 0.0004427343
    %v397 = vsel %vm396, %v394, %v391
    %v398 = vadd.f32 %v332, 1.0
    %v399 = vlog2.pop %v398
    %v400 = vmul.f32 %v399, 0.6931472
    %v401 = vmul.f32 -0.5, %v332
    %v402 = vadd.f32 %v401, 1.0
    %v403 = vmul.f32 %v402, %v332
    %v404 = vand.u32 2147483647, %v332
    %vm405 = vcmp.lt.f32.partialorder %v404, 0.0004427343
    %v406 = vsel %vm405, %v403, %v400
    %v407 = vadd.f32 %v334, 1.0
    %v408 = vlog2.pop %v407
    %v409 = vmul.f32 %v408, 0.6931472
    %v410 = vmul.f32 -0.5, %v334
    %v411 = vadd.f32 %v410, 1.0
    %v412 = vmul.f32 %v411, %v334
    %v413 = vand.u32 2147483647, %v334
    %vm414 = vcmp.lt.f32.partialorder %v413, 0.0004427343
    %v415 = vsel %vm414, %v412, %v409
    %v416 = vadd.f32 %v336, 1.0
    %v417 = vlog2.pop %v416
    %v418 = vmul.f32 %v417, 0.6931472
    %v419 = vmul.f32 -0.5, %v336
    %v420 = vadd.f32 %v419, 1.0
    %v421 = vmul.f32 %v420, %v336
    %v422 = vand.u32 2147483647, %v336
    %vm423 = vcmp.lt.f32.partialorder %v422, 0.0004427343
    %v424 = vsel %vm423, %v421, %v418
    %v425 = vadd.f32 %v338, 1.0
    %v426 = vlog2.pop %v425
    %v427 = vmul.f32 %v426, 0.6931472
    %v428 = vmul.f32 -0.5, %v338
    %v429 = vadd.f32 %v428, 1.0
    %v430 = vmul.f32 %v429, %v338
    %v431 = vand.u32 2147483647, %v338
    %vm432 = vcmp.lt.f32.partialorder %v431, 0.0004427343
    %v433 = vsel %vm432, %v430, %v427
    %v434 = vadd.f32 %v340, 1.0
    %v435 = vlog2.pop %v434
    %v436 = vmul.f32 %v435, 0.6931472
    %v437 = vmul.f32 -0.5, %v340
    %v438 = vadd.f32 %v437, 1.0
    %v439 = vmul.f32 %v438, %v340
    %v440 = vand.u32 2147483647, %v340
    %vm441 = vcmp.lt.f32.partialorder %v440, 0.0004427343
    %v442 = vsel %vm441, %v439, %v436
    %v443 = vadd.f32 %v342, 1.0
    %v444 = vlog2.pop %v443
    %v445 = vmul.f32 %v444, 0.6931472
    %v446 = vmul.f32 -0.5, %v342
    %v447 = vadd.f32 %v446, 1.0
    %v448 = vmul.f32 %v447, %v342
    %v449 = vand.u32 2147483647, %v342
    %vm450 = vcmp.lt.f32.partialorder %v449, 0.0004427343
    %v451 = vsel %vm450, %v448, %v445
    %v452 = vadd.f32 %v344, 1.0
    %v453 = vlog2.pop %v452
    %v454 = vmul.f32 %v453, 0.6931472
    %v455 = vmul.f32 -0.5, %v344
    %v456 = vadd.f32 %v455, 1.0
    %v457 = vmul.f32 %v456, %v344
    %v458 = vand.u32 2147483647, %v344
    %vm459 = vcmp.lt.f32.partialorder %v458, 0.0004427343
    %v460 = vsel %vm459, %v457, %v454
    %v461 = vadd.f32 %v346, 1.0
    %v462 = vlog2.pop %v461
    %v463 = vmul.f32 %v462, 0.6931472
    %v464 = vmul.f32 -0.5, %v346
    %v465 = vadd.f32 %v464, 1.0
    %v466 = vmul.f32 %v465, %v346
    %v467 = vand.u32 2147483647, %v346
    %vm468 = vcmp.lt.f32.partialorder %v467, 0.0004427343
    %v469 = vsel %vm468, %v466, %v463
    %v470 = vadd.f32 %v348, 1.0
    %v471 = vlog2.pop %v470
    %v472 = vmul.f32 %v471, 0.6931472
    %v473 = vmul.f32 -0.5, %v348
    %v474 = vadd.f32 %v473, 1.0
    %v475 = vmul.f32 %v474, %v348
    %v476 = vand.u32 2147483647, %v348
    %vm477 = vcmp.lt.f32.partialorder %v476, 0.0004427343
    %v478 = vsel %vm477, %v475, %v472
    %v479 = vadd.f32 %v350, 1.0
    %v480 = vlog2.pop %v479
    %v481 = vmul.f32 %v480, 0.6931472
    %v482 = vmul.f32 -0.5, %v350
    %v483 = vadd.f32 %v482, 1.0
    %v484 = vmul.f32 %v483, %v350
    %v485 = vand.u32 2147483647, %v350
    %vm486 = vcmp.lt.f32.partialorder %v485, 0.0004427343
    %v487 = vsel %vm486, %v484, %v481
    %v488 = vadd.f32 %v352, 1.0
    %v489 = vlog2.pop %v488
    %v490 = vmul.f32 %v489, 0.6931472
    %v491 = vmul.f32 -0.5, %v352
    %v492 = vadd.f32 %v491, 1.0
    %v493 = vmul.f32 %v492, %v352
    %v494 = vand.u32 2147483647, %v352
    %vm495 = vcmp.lt.f32.partialorder %v494, 0.0004427343
    %v496 = vsel %vm495, %v493, %v490
    %v497 = vadd.f32 %v241, %v361
    %v498 = vadd.f32 %v242, %v370
    %v499 = vadd.f32 %v243, %v379
    %v500 = vadd.f32 %v244, %v388
    %v501 = vadd.f32 %v245, %v397
    %v502 = vadd.f32 %v246, %v406
    %v503 = vadd.f32 %v247, %v415
    %v504 = vadd.f32 %v248, %v424
    %v505 = vadd.f32 %v249, %v433
    %v506 = vadd.f32 %v250, %v442
    %v507 = vadd.f32 %v251, %v451
    %v508 = vadd.f32 %v252, %v460
    %v509 = vadd.f32 %v253, %v469
    %v510 = vadd.f32 %v254, %v478
    %v511 = vadd.f32 %v255, %v487
    %v512 = vadd.f32 %v256, %v496
    %v513 = vsel %vm257, %v273, %v497
    %v514 = vsel %vm258, %v274, %v498
    %v515 = vsel %vm259, %v275, %v499
    %v516 = vsel %vm260, %v276, %v500
    %v517 = vsel %vm261, %v277, %v501
    %v518 = vsel %vm262, %v278, %v502
    %v519 = vsel %vm263, %v279, %v503
    %v520 = vsel %vm264, %v280, %v504
    %v521 = vsel %vm265, %v281, %v505
    %v522 = vsel %vm266, %v282, %v506
    %v523 = vsel %vm267, %v283, %v507
    %v524 = vsel %vm268, %v284, %v508
    %v525 = vsel %vm269, %v285, %v509
    %v526 = vsel %vm270, %v286, %v510
    %v527 = vsel %vm271, %v287, %v511
    %v528 = vsel %vm272, %v288, %v512
    %v529 = vld [vmem:[%s3] sm:$0x1]
    %s530 = sld [smem:[#allocation2]]
    %v531 = vstv %s530
    %vm532 = vcmask 523264
    %v534 = vsel %vm532, %v529, 0
    %v537 = vsel %vm532, %v513, 0
    %v540 = vsel %vm532, %v514, 0
    %v543 = vsel %vm532, %v515, 0
    %v546 = vsel %vm532, %v516, 0
    %v549 = vsel %vm532, %v517, 0
    %v552 = vsel %vm532, %v518, 0
    %v555 = vsel %vm532, %v519, 0
    %v558 = vsel %vm532, %v520, 0
    %v561 = vsel %vm532, %v521, 0
    %v564 = vsel %vm532, %v522, 0
    %v567 = vsel %vm532, %v523, 0
    %v570 = vsel %vm532, %v524, 0
    %v573 = vsel %vm532, %v525, 0
    %v576 = vsel %vm532, %v526, 0
    %v579 = vsel %vm532, %v527, 0
    %v582 = vsel %vm532, %v528, 0
    %584 = vmatprep.subr.mxu0 0.0
    %585 = vmatpush1.xpose.msra.mxu0 %v537
    %586 = vmatprep.subr.mxu0 0.0
    %587 = vmatpush1.xpose.msra.mxu0 %v540
    %588 = vmatprep.subr.mxu0 0.0
    %589 = vmatpush1.xpose.msra.mxu0 %v543
    %590 = vmatprep.subr.mxu0 0.0
    %591 = vmatpush1.xpose.msra.mxu0 %v546
    %592 = vmatprep.subr.mxu0 0.0
    %593 = vmatpush1.xpose.msra.mxu0 %v549
    %594 = vmatprep.subr.mxu0 0.0
    %595 = vmatpush1.xpose.msra.mxu0 %v552
    %596 = vmatprep.subr.mxu0 0.0
    %597 = vmatpush1.xpose.msra.mxu0 %v555
    %598 = vmatprep.subr.mxu0 0.0
    %599 = vmatpush1.xpose.msra.mxu0 %v558
    %600 = vmatprep.subr.mxu0 0.0
    %601 = vmatpush1.xpose.msra.mxu0 %v561
    %602 = vmatprep.subr.mxu0 0.0
    %603 = vmatpush1.xpose.msra.mxu0 %v564
    %604 = vmatprep.subr.mxu0 0.0
    %605 = vmatpush1.xpose.msra.mxu0 %v567
    %606 = vmatprep.subr.mxu0 0.0
    %607 = vmatpush1.xpose.msra.mxu0 %v570
    %608 = vmatprep.subr.mxu0 0.0
    %609 = vmatpush1.xpose.msra.mxu0 %v573
    %610 = vmatprep.subr.mxu0 0.0
    %611 = vmatpush1.xpose.msra.mxu0 %v576
    %612 = vmatprep.subr.mxu0 0.0
    %613 = vmatpush1.xpose.msra.mxu0 %v579
    %614 = vmatprep.subr.mxu0 0.0
    %615 = vmatpush1.xpose.msra.mxu0 %v582
    %616 = vmatprep.subr.mxu0 0.0
    %617 = vmatpush1.xpose.msra.mxu0 0.0
    %618 = vmatprep.subr.mxu0 0.0
    %619 = vmatpush1.xpose.msra.mxu0 0.0
    %620 = vmatprep.subr.mxu0 0.0
    %621 = vmatpush1.xpose.msra.mxu0 0.0
    %622 = vmatprep.subr.mxu0 0.0
    %623 = vmatpush1.xpose.msra.mxu0 0.0
    %624 = vmatprep.subr.mxu0 0.0
    %625 = vmatpush1.xpose.msra.mxu0 0.0
    %626 = vmatprep.subr.mxu0 0.0
    %627 = vmatpush1.xpose.msra.mxu0 0.0
    %628 = vmatprep.subr.mxu0 0.0
    %629 = vmatpush1.xpose.msra.mxu0 0.0
    %630 = vmatprep.subr.mxu0 0.0
    %631 = vmatpush1.xpose.msra.mxu0 0.0
    %632 = vmatprep.subr.mxu0 0.0
    %633 = vmatpush1.xpose.msra.mxu0 0.0
    %634 = vmatprep.subr.mxu0 0.0
    %635 = vmatpush1.xpose.msra.mxu0 0.0
    %636 = vmatprep.subr.mxu0 0.0
    %637 = vmatpush1.xpose.msra.mxu0 0.0
    %638 = vmatprep.subr.mxu0 0.0
    %639 = vmatpush1.xpose.msra.mxu0 0.0
    %640 = vmatprep.subr.mxu0 0.0
    %641 = vmatpush1.xpose.msra.mxu0 0.0
    %642 = vmatprep.subr.mxu0 0.0
    %643 = vmatpush1.xpose.msra.mxu0 0.0
    %644 = vmatprep.subr.mxu0 0.0
    %645 = vmatpush1.xpose.msra.mxu0 0.0
    %646 = vmatprep.subr.mxu0 0.0
    %647 = vmatpush1.xpose.msra.mxu0 0.0
    %648 = vmatprep.mubr.f32.mxu0 0.0
    %649 = vmatmul.mubr.f32.gmra.mrb[0].mxu0 %v534
    %v650 = vpop.f32.mrb[0].mxu0
    %v651 = vadd.f32 %v531, %v650
    %v652 = vpop.f32.mrb[0].mxu0
    %653 = vdwg.mxu0
    %654 = vst [vmem:[#allocation3] sm:$0x1] %v651
    // Predicated region
    $region22: #{tpu_custom_call.1} parent=1 // pred_check
      _
    $region23: #{tpu_custom_call.1} parent=1 // pred_check_branch
      %656 = sbr.rel (0) target = $region25
    $region24: #{tpu_custom_call.1} parent=1 // pred_region
      %s658 = ssub.s32 16, 16
      %659 = vsyncadd [#allocation4], %s658
      %s661 = sshll.u32 [#allocation3], 4
      %s662 = int_to_ptr.vmem [resolvable:$true] %s661
      %664 = dma.vmem_to_hbm [thread:$0]  %s662, 16, %s5, [#allocation4]
    $region25: #{tpu_custom_call.1} parent=1 // pred_fallthru
      _
    // Predicated region
    $region26: #{tpu_custom_call.1} parent=1 // pred_check
      _
    $region27: #{tpu_custom_call.1} parent=1 // pred_check_branch
      %666 = sbr.rel (0) target = $region29
    $region28: #{tpu_custom_call.1} parent=1 // pred_region
      %667 = dma.done [#allocation4], 16
    $region29: #{tpu_custom_call.1} parent=1 // pred_fallthru
      _
    %668 = vsyncpa [#allocation4], 1

</llo_original>
